<compile_context>
chip_gen: v5e
topology: v5e:2x2
jax: 0.10.0
libtpu: 0.0.40
codegen_flags: <defaults>
</compile_context>

<pallas_src>
import math

import jax
import jax.numpy as jnp
from jax.experimental import pallas as pl
from jax.experimental.pallas import tpu as pltpu

_LANE = 128      # lane width (last-dim tiling unit)
_SUBLANE = 8     # sublane width (second-to-last-dim tiling unit)


def _round_up(v: int, m: int) -> int:
    return ((v + m - 1) // m) * m


# -----------------------------------------------------------------------------
# One-time parameter preparation (init-time work, NOT per forward call).
# -----------------------------------------------------------------------------
def prepare_linear_params(weight, bias, *, operand_dtype=None):
    """Pad + transpose nn.Linear parameters once.

    weight: [C, F]  (PyTorch nn.Linear layout)
    bias:   [C]
    Returns:
      w_t:   [F, C_pad]  lane-dense, plain [K, N] MXU layout (optionally bf16)
      b_row: [1, C_pad]  f32 bias row (added to the f32 dot result)
    """
    C, F = weight.shape
    C_pad = _round_up(C, _LANE)
    w_t = jnp.pad(weight, ((0, C_pad - C), (0, 0))).T            # [F, C_pad]
    if operand_dtype is not None:
        w_t = w_t.astype(operand_dtype)
    b_row = jnp.pad(bias, (0, C_pad - C)).reshape(1, C_pad).astype(jnp.float32)
    return w_t, b_row


# -----------------------------------------------------------------------------
# Kernels
# -----------------------------------------------------------------------------
def _linear_kernel(x_ref, w_ref, b_ref, o_ref):
    """Single-k fast path: one batch tile, whole contraction in VMEM.

    x_ref: (TB, F)       operand dtype
    w_ref: (F, C_pad)    operand dtype (resident: constant block index)
    b_ref: (1, C_pad)    f32
    o_ref: (TB, C_pad)   lane-dense output tile
    """
    o_ref[...] = (
        jnp.dot(x_ref[...], w_ref[...], preferred_element_type=jnp.float32)
        + b_ref[...]
    ).astype(o_ref.dtype)


def _linear_kernel_acc(x_ref, w_ref, b_ref, o_ref, acc_ref):
    """Fallback for F > tk_max: tiled contraction with an f32 VMEM accumulator."""
    k = pl.program_id(1)

    @pl.when(k == 0)
    def _():
        acc_ref[...] = jnp.zeros_like(acc_ref)

    acc_ref[...] += jnp.dot(x_ref[...], w_ref[...],
                            preferred_element_type=jnp.float32)

    @pl.when(k == pl.num_programs(1) - 1)
    def _():
        o_ref[...] = (acc_ref[...] + b_ref[...]).astype(o_ref.dtype)


# -----------------------------------------------------------------------------
# Wrapper
# -----------------------------------------------------------------------------
def softmax_regression_forward(x, w_t, b_row, num_classes, *,
                               tb_max=512, tk_max=2048,
                               min_batch_tiles=1,   # set >= 2 on v7x so both TCs get work
                               out_dtype=jnp.float32):
    """logits = x @ W.T + b with prepared params (w_t=[F, C_pad], b_row=[1, C_pad])."""
    B, F = x.shape
    Fw, C_pad = w_t.shape
    assert Fw == F, "prepared weight feature dim mismatch"

    x = x.astype(w_t.dtype)   # bf16 operand path halves x HBM traffic; acc stays f32
    itemsize = jnp.dtype(w_t.dtype).itemsize

    # --- batch tiling: avoid the B_pad cliff (pad at most a few rows) ----------
    n_b = max(-(-B // tb_max), min_batch_tiles)
    if n_b == 1:
        TB = B                                         # full-dim block: zero row padding
    else:
        TB = _round_up(-(-B // n_b), _SUBLANE)
    grid_b = -(-B // TB)
    B_pad = grid_b * TB

    # --- contraction tiling -----------------------------------------------------
    single_k = F <= tk_max
    if single_k:
        TK, F_pad, grid_k = F, F, 1                    # no feature padding needed
    else:
        TK = tk_max
        F_pad = _round_up(F, TK)
        grid_k = F_pad // TK

    # Pad x only when strictly required (few rows, and F only on the fallback path).
    if (B_pad != B) or (F_pad != F):
        x = jnp.pad(x, ((0, B_pad - B), (0, F_pad - F)))
    if F_pad != F:
        # TODO(synk): for F > tk_max, pre-pad w_t at init instead of per call.
        w_t = jnp.pad(w_t, ((0, F_pad - F), (0, 0)))

    cost = pl.CostEstimate(
        flops=2 * B_pad * F_pad * C_pad,
        bytes_accessed=(B_pad * F_pad + F_pad * C_pad) * itemsize
                       + (B_pad * C_pad + C_pad) * jnp.dtype(out_dtype).itemsize,
        transcendentals=0,
    )

    if single_k:
        out_padded = pl.pallas_call(
            _linear_kernel,
            out_shape=jax.ShapeDtypeStruct((B_pad, C_pad), out_dtype),
            grid_spec=pltpu.PrefetchScalarGridSpec(
                num_scalar_prefetch=0,
                grid=(grid_b,),
                in_specs=[
                    pl.BlockSpec((TB, F), lambda i: (i, 0)),        # x batch tile
                    pl.BlockSpec((F, C_pad), lambda i: (0, 0)),     # weight (resident)
                    pl.BlockSpec((1, C_pad), lambda i: (0, 0)),     # bias (resident)
                ],
                out_specs=pl.BlockSpec((TB, C_pad), lambda i: (i, 0)),
            ),
            compiler_params=pltpu.CompilerParams(
                dimension_semantics=("parallel",)),
            cost_estimate=cost,
        )(x, w_t, b_row)
    else:
        out_padded = pl.pallas_call(
            _linear_kernel_acc,
            out_shape=jax.ShapeDtypeStruct((B_pad, C_pad), out_dtype),
            grid_spec=pltpu.PrefetchScalarGridSpec(
                num_scalar_prefetch=0,
                grid=(grid_b, grid_k),
                in_specs=[
                    pl.BlockSpec((TB, TK), lambda i, k: (i, k)),
                    pl.BlockSpec((TK, C_pad), lambda i, k: (k, 0)),
                    pl.BlockSpec((1, C_pad), lambda i, k: (0, 0)),
                ],
                out_specs=pl.BlockSpec((TB, C_pad), lambda i, k: (i, 0)),
                scratch_shapes=[pltpu.VMEM((TB, C_pad), jnp.float32)],
            ),
            compiler_params=pltpu.CompilerParams(
                dimension_semantics=("parallel", "arbitrary")),
            cost_estimate=cost,
        )(x, w_t, b_row)

    if (B_pad != B) or (C_pad != num_classes):
        # Note: a fused downstream softmax/CE could consume the padded logits directly
        # (masking padded classes) and skip this extra HBM pass over the logits.
        out_padded = out_padded[:B, :num_classes]
    return out_padded


# -----------------------------------------------------------------------------
# Self-test
# -----------------------------------------------------------------------------
if __name__ == "__main__":
    # Small shapes consistent with the module: batch=8, features=32, classes=16.
    batch, number_of_features, number_of_classes = 8, 32, 16

    key = jax.random.PRNGKey(0)
    k_x, k_w, k_b = jax.random.split(key, 3)

    # Deterministic init mimicking nn.Linear's uniform(-1/sqrt(fan_in), 1/sqrt(fan_in)).
    bound = 1.0 / math.sqrt(number_of_features)
    weight = jax.random.uniform(
        k_w, (number_of_classes, number_of_features),
        minval=-bound, maxval=bound, dtype=jnp.float32)
    bias = jax.random.uniform(
        k_b, (number_of_classes,), minval=-bound, maxval=bound, dtype=jnp.float32)

    x = jax.random.normal(k_x, (batch, number_of_features), dtype=jnp.float32)

    ref = x @ weight.T + bias

    # f32 path (exact forward semantics of the PyTorch module).
    w_t, b_row = prepare_linear_params(weight, bias)
    logits = softmax_regression_forward(x, w_t, b_row, number_of_classes)
    logits = jax.block_until_ready(logits)
    assert logits.shape == (batch, number_of_classes)
    assert jnp.allclose(logits, ref, atol=1e-5, rtol=1e-5)

    # Optional bf16-operand path (halved HBM traffic, f32 accumulation) — looser tolerance.
    w_t16, b_row16 = prepare_linear_params(weight, bias, operand_dtype=jnp.bfloat16)
    logits_bf16 = jax.block_until_ready(
        softmax_regression_forward(x, w_t16, b_row16, number_of_classes))
    assert jnp.allclose(logits_bf16, ref, atol=5e-2, rtol=5e-2)

    print("KERNEL_OK")
</pallas_src>

<mosaic_0001>
module attributes {stable_mosaic.version = 11 : i64} {
  func.func @_linear_kernel(%arg0: i32, %arg1: memref<8x32xf32, #tpu.memory_space<vmem>>, %arg2: memref<32x128xf32, #tpu.memory_space<vmem>>, %arg3: memref<1x128xf32, #tpu.memory_space<vmem>>, %arg4: memref<8x128xf32, #tpu.memory_space<vmem>>) attributes {dimension_semantics = [#tpu.dimension_semantics<parallel>], iteration_bounds = array<i64: 1>, scalar_prefetch = 0 : i64, scratch_operands = 0 : i64, tpu.core_type = #tpu.core_type<tc>, window_params = [{transform_indices = @transform_0, window_bounds = array<i64: 8, 32>}, {pipeline_mode = #tpu.pipeline_mode<synchronous>, transform_indices = @transform_1, window_bounds = array<i64: 32, 128>}, {pipeline_mode = #tpu.pipeline_mode<synchronous>, transform_indices = @transform_2, window_bounds = array<i64: 1, 128>}, {transform_indices = @transform_3, window_bounds = array<i64: 8, 128>}]} {
    %c0 = arith.constant 0 : index
    %c0_0 = arith.constant 0 : index
    %0 = vector.load %arg1[%c0, %c0_0] : memref<8x32xf32, #tpu.memory_space<vmem>>, vector<8x32xf32>
    %c0_1 = arith.constant 0 : index
    %c0_2 = arith.constant 0 : index
    %1 = vector.load %arg2[%c0_1, %c0_2] : memref<32x128xf32, #tpu.memory_space<vmem>>, vector<32x128xf32>
    %cst = arith.constant dense<0.000000e+00> : vector<8x128xf32>
    %2 = tpu.matmul %0, %1, %cst {dimension_numbers = #tpu.dot_dimension_numbers<[1], [0], [0], [1], [0, 0, 1, 1], [], []>} : vector<8x32xf32>, vector<32x128xf32>, vector<8x128xf32> -> vector<8x128xf32>
    %c0_3 = arith.constant 0 : index
    %c0_4 = arith.constant 0 : index
    %3 = vector.load %arg3[%c0_3, %c0_4] : memref<1x128xf32, #tpu.memory_space<vmem>>, vector<1x128xf32>
    %4 = vector.broadcast %3 : vector<1x128xf32> to vector<8x128xf32>
    %5 = arith.addf %2, %4 : vector<8x128xf32>
    %c0_5 = arith.constant 0 : index
    %c0_6 = arith.constant 0 : index
    %6 = vector.load %arg4[%c0_5, %c0_6] : memref<8x128xf32, #tpu.memory_space<vmem>>, vector<8x128xf32>
    tpu.vector_store %arg4[%c0_5, %c0_6], %5 {strides = array<i32>} : memref<8x128xf32, #tpu.memory_space<vmem>>, vector<8x128xf32>,
    return
  }
  func.func @transform_0(%arg0: i32) -> (i32, i32) {
    %c0_i32 = arith.constant 0 : i32
    %c0_i32_0 = arith.constant 0 : i32
    return %arg0, %c0_i32 : i32, i32
  }
  func.func @transform_1(%arg0: i32) -> (i32, i32) {
    %c0_i32 = arith.constant 0 : i32
    %c0_i32_0 = arith.constant 0 : i32
    %c0_i32_1 = arith.constant 0 : i32
    return %c0_i32, %c0_i32_0 : i32, i32
  }
  func.func @transform_2(%arg0: i32) -> (i32, i32) {
    %c0_i32 = arith.constant 0 : i32
    %c0_i32_0 = arith.constant 0 : i32
    %c0_i32_1 = arith.constant 0 : i32
    return %c0_i32, %c0_i32_0 : i32, i32
  }
  func.func @transform_3(%arg0: i32) -> (i32, i32) {
    %c0_i32 = arith.constant 0 : i32
    %c0_i32_0 = arith.constant 0 : i32
    return %arg0, %c0_i32 : i32, i32
  }
}

</mosaic_0001>

<llo_original>
// kernel: tpu_custom_call.1
$region0: #{tpu_custom_call.1}
  #allocation0 [shape = 'u32[]', space=smem, size = 0x4, offset = 0x4, fixed_abs, tag = 'smem constant byte address 0x4 - core index']
  #allocation1 [shape = 'u32[72,128]{1,0:T(1,128)}', space=vmem, size = 0x9000, scoped, tag = 'internal scratch']
  %s0 = inlined_call_operand.hbm [shape: f32[8,32], index: 0, kind: input, shape index: {}]
  %s1 = inlined_call_operand.hbm [shape: f32[32,128], index: 1, kind: input, shape index: {}]
  %s2 = inlined_call_operand.vmem [shape: f32[1,128], index: 2, kind: input, shape index: {}]
  %s3 = inlined_call_operand.hbm [shape: f32[8,128], index: 3, kind: output, shape index: {}]
  %s4 = sld [smem:[#allocation0]]
  $region30: #{tpu_custom_call.1} parent=0
    _
  %s6 = ssub.s32 1, %s4
  %s7 = scalar_select 0, %s6, %s4
  $region1: #{tpu_custom_call.1} parent=0
    #allocation2 [shape = 'u8[4096]{0}', space=vmem, size = 0x1000, scoped, tag = 'input window, operand 0, single buffered']
    #allocation3 [shape = 's32[1]{0}', space=sflag, size = 0x4, scoped, tag = 'scoped memory for tpu_custom_call.1']
    #allocation4 [shape = 's32[1]{0}', space=sflag, size = 0x4, scoped, tag = 'scoped memory for tpu_custom_call.1']
    #allocation5 [shape = 'u8[16384]{0}', space=vmem, size = 0x4000, scoped, tag = 'input window, operand 1, single buffered']
    #allocation6 [shape = 's32[1]{0}', space=sflag, size = 0x4, scoped, tag = 'scoped memory for tpu_custom_call.1']
    #allocation7 [shape = 'u8[4096]{0}', space=vmem, size = 0x1000, scoped, tag = 'output window, operand 0, single buffered']
    %8 = vsyncpa [#allocation3], 0
    %9 = vsyncpa [#allocation6], 0
    %10 = vsyncpa [#allocation4], 0
    // Predicated region
    $region2: #{tpu_custom_call.1} parent=1 // pred_check
      _
    $region3: #{tpu_custom_call.1} parent=1 // pred_check_branch
      %12 = sbr.rel (0) target = $region5
    $region4: #{tpu_custom_call.1} parent=1 // pred_region
      %14 = vsyncadd [#allocation3], 0
      %s16 = sshll.u32 %s0, 4
      %s17 = int_to_ptr.hbm [resolvable:$true] %s16
      %s18 = sshll.u32 [#allocation2], 4
      %s19 = int_to_ptr.vmem [resolvable:$true] %s18
      %21 = dma.hbm_to_vmem [thread:$0]  %s17, 128, %s19, [#allocation3]
    $region5: #{tpu_custom_call.1} parent=1 // pred_fallthru
      _
    // Predicated region
    $region6: #{tpu_custom_call.1} parent=1 // pred_check
      _
    $region7: #{tpu_custom_call.1} parent=1 // pred_check_branch
      %23 = sbr.rel (0) target = $region9
    $region8: #{tpu_custom_call.1} parent=1 // pred_region
      %25 = vsyncadd [#allocation6], 0
      %s26 = sshll.u32 %s1, 4
      %s27 = int_to_ptr.hbm [resolvable:$true] %s26
      %s28 = sshll.u32 [#allocation5], 4
      %s29 = int_to_ptr.vmem [resolvable:$true] %s28
      %34 = dma.hbm_to_vmem [thread:$0]  %s27, 512, %s29, [#allocation6], 128, 128, 8
    $region9: #{tpu_custom_call.1} parent=1 // pred_fallthru
      _
    // Predicated region
    $region10: #{tpu_custom_call.1} parent=1 // pred_check
      _
    $region11: #{tpu_custom_call.1} parent=1 // pred_check_branch
      %36 = sbr.rel (0) target = $region13
    $region12: #{tpu_custom_call.1} parent=1 // pred_region
      _
    $region13: #{tpu_custom_call.1} parent=1 // pred_fallthru
      _
    // Predicated region
    $region14: #{tpu_custom_call.1} parent=1 // pred_check
      _
    $region15: #{tpu_custom_call.1} parent=1 // pred_check_branch
      %38 = sbr.rel (0) target = $region17
    $region16: #{tpu_custom_call.1} parent=1 // pred_region
      %40 = dma.done [#allocation3], 128
    $region17: #{tpu_custom_call.1} parent=1 // pred_fallthru
      _
    // Predicated region
    $region18: #{tpu_custom_call.1} parent=1 // pred_check
      _
    $region19: #{tpu_custom_call.1} parent=1 // pred_check_branch
      %42 = sbr.rel (0) target = $region21
    $region20: #{tpu_custom_call.1} parent=1 // pred_region
      %44 = dma.done [#allocation6], 512
    $region21: #{tpu_custom_call.1} parent=1 // pred_fallthru
      _
    %v45 = vld [vmem:[#allocation2] sm:$0xff]
    %v46 = vld [vmem:[#allocation5] sm:$0xff]
    %v47 = vld [vmem:[#allocation5 + $0x8] sm:$0xff]
    %v48 = vld [vmem:[#allocation5 + $0x10] sm:$0xff]
    %v49 = vld [vmem:[#allocation5 + $0x18] sm:$0xff]
    %v50 = vld [vmem:[%s2] sm:$0x1]
    %v52 = vperm.slane %v50, 0
    %vm54 = vcmask 261120
    %v56 = vsel %vm54, %v45, 0
    %58 = vmatpush.msra.mxu0 0.0
    %59 = vmatpush.msra.mxu0 0.0
    %60 = vmatpush.msra.mxu0 0.0
    %61 = vmatpush.msra.mxu0 0.0
    %62 = vmatpush.msra.mxu0 0.0
    %63 = vmatpush.msra.mxu0 0.0
    %64 = vmatpush.msra.mxu0 0.0
    %65 = vmatpush.msra.mxu0 0.0
    %66 = vmatpush.msra.mxu0 0.0
    %67 = vmatpush.msra.mxu0 0.0
    %68 = vmatpush.msra.mxu0 0.0
    %69 = vmatpush.msra.mxu0 0.0
    %70 = vmatpush.msra.mxu0 %v49
    %71 = vmatpush.msra.mxu0 %v48
    %72 = vmatpush.msra.mxu0 %v47
    %73 = vmatpush.msra.mxu0 %v46
    %74 = vmatmul.f32.gmra.mxu0 %v56
    %v75 = vpop.f32.mrf.mxu0
    %v76 = vadd.f32 %v52, %v75
    %77 = vdwg.mxu0
    %78 = vst [vmem:[#allocation7] sm:$0xff] %v76
    // Predicated region
    $region22: #{tpu_custom_call.1} parent=1 // pred_check
      _
    $region23: #{tpu_custom_call.1} parent=1 // pred_check_branch
      %80 = sbr.rel (0) target = $region25
    $region24: #{tpu_custom_call.1} parent=1 // pred_region
      %82 = vsyncadd [#allocation4], 0
      %s84 = sshll.u32 [#allocation7], 4
      %s85 = int_to_ptr.vmem [resolvable:$true] %s84
      %s86 = sshll.u32 %s3, 4
      %s87 = int_to_ptr.hbm [resolvable:$true] %s86
      %89 = dma.vmem_to_hbm [thread:$0]  %s85, 128, %s87, [#allocation4]
    $region25: #{tpu_custom_call.1} parent=1 // pred_fallthru
      _
    // Predicated region
    $region26: #{tpu_custom_call.1} parent=1 // pred_check
      _
    $region27: #{tpu_custom_call.1} parent=1 // pred_check_branch
      %91 = sbr.rel (0) target = $region29
    $region28: #{tpu_custom_call.1} parent=1 // pred_region
      %93 = dma.done [#allocation4], 128
    $region29: #{tpu_custom_call.1} parent=1 // pred_fallthru
      _
    %94 = vsyncpa [#allocation3], 1
    %95 = vsyncpa [#allocation6], 1
    %96 = vsyncpa [#allocation4], 1

</llo_original>
